<compile_context>
chip_gen: v5e
topology: v5e:2x2
jax: 0.10.0
libtpu: 0.0.40
codegen_flags: <defaults>
</compile_context>

<pallas_src>
import functools

import jax
import jax.numpy as jnp
from jax.experimental import pallas as pl
from jax.experimental.pallas import tpu as pltpu

INPUT_DIM = 32
HIDDEN_DIMS = [128, 64, 32]
LN_EPS = 1e-5                 # PyTorch nn.LayerNorm default
DEFAULT_TILE_BATCH = 2048     # batch rows per grid step (sweep 1024 / 2048 / 4096)
MIN_TILE_BATCH = 128          # keep per-step overhead amortized
TARGET_GRID_STEPS = 4         # >= 2 (ideally >= 4) steps so v7x's two TCs both get work


def _round_up(n, m):
    return ((n + m - 1) // m) * m


def _linear_ln_relu(h, w, b, gamma, beta):
    """Linear -> LayerNorm -> ReLU (Dropout(0.1) is identity at inference).

    Linear runs on the MXU (bf16 operands, f32 accumulation).  LayerNorm's row
    reductions run in f32 on the VPU/XLU (jnp.sum) so the MXU only does the real
    matmuls; variance is the numerically safe two-pass E[(y-mean)^2] (still the
    biased variance PyTorch LN uses).
    """
    y = jnp.dot(h.astype(w.dtype), w, preferred_element_type=jnp.float32) + b
    hdim = y.shape[-1]
    inv_h = jnp.float32(1.0 / hdim)
    mean = jnp.sum(y, axis=-1, keepdims=True) * inv_h
    d = y - mean
    var = jnp.sum(d * d, axis=-1, keepdims=True) * inv_h
    rstd = jax.lax.rsqrt(var + LN_EPS)                 # EUP
    y = d * rstd * gamma + beta
    # TODO(synk): on v6e/v7x the affine+ReLU tail could run in bf16 (native bf16 VALU,
    # ~2x fewer VPU ops); kept f32 so v5e (no bf16 VPU) takes no emulation hit.
    return jnp.maximum(y, 0.0)


def surrogate_kernel(
    x_ref,
    w1_ref, b1_ref, g1_ref, be1_ref,
    w2_ref, b2_ref, g2_ref, be2_ref,
    w3_ref, b3_ref, g3_ref, be3_ref,
    w4_ref, b4_ref,
    out_ref,
):
    h = x_ref[...]   # (TB, 32) f32; bf16 cast happens inside each matmul helper (VPU)
    h = _linear_ln_relu(h, w1_ref[...], b1_ref[...], g1_ref[...], be1_ref[...])
    h = _linear_ln_relu(h, w2_ref[...], b2_ref[...], g2_ref[...], be2_ref[...])
    h = _linear_ln_relu(h, w3_ref[...], b3_ref[...], g3_ref[...], be3_ref[...])
    # Final Linear(32, 1): per-row dot product as broadcast-multiply + lane reduce
    # (VPU/XLU) instead of a skinny N=1 MXU matmul.
    out = jnp.sum(h * w4_ref[...], axis=-1, keepdims=True) + b4_ref[...]
    # TODO(synk): a lane-dense (1, TB) output slab would replace the masked (TB, 1)
    # column stores, but needs a sublane->lane relayout that costs more than the
    # 4 B/row writeback it saves here.
    out_ref[...] = out.astype(out_ref.dtype)


@functools.partial(jax.jit, static_argnames=("tile_batch",))
def surrogate_forward(x, params, tile_batch=DEFAULT_TILE_BATCH):
    """Fused SurrogateNetwork forward. x: (B, INPUT_DIM) f32 -> (B,) f32."""
    batch = x.shape[0]
    (w1, b1, g1, be1, w2, b2, g2, be2, w3, b3, g3, be3, w4, b4) = params

    # Weights cast to bf16 once (tiny, VMEM-resident across all grid steps).
    # x stays f32 in HBM; its bf16 cast happens in-kernel under the pipeline.
    bf16 = jnp.bfloat16
    w1b, w2b, w3b = (w.astype(bf16) for w in (w1, w2, w3))
    w4_row = w4.reshape(1, INPUT_DIM if len(HIDDEN_DIMS) == 0 else HIDDEN_DIMS[-1])  # (1, 32) f32

    # Ragged batches: rely on Pallas partial-block masking (rows are independent,
    # masked rows can't leak).  Only align to the 8-row sublane when needed (<=7 rows).
    x_in = x
    b_pad = batch
    if batch % 8 != 0:
        b_pad = _round_up(batch, 8)
        x_in = jnp.pad(x, ((0, b_pad - batch), (0, 0)))

    # Batch tile: big (amortizes per-step overhead) but with >= TARGET_GRID_STEPS steps
    # when the batch allows it (megacore on v7x, pipeline depth) and never > batch.
    tb = max(8, (int(tile_batch) // 8) * 8)
    tb = min(tb, max(MIN_TILE_BATCH, _round_up(pl.cdiv(b_pad, TARGET_GRID_STEPS), 8)))
    tb = min(tb, b_pad)
    grid = (pl.cdiv(b_pad, tb),)

    def resident(arr):
        # Constant block index -> stays VMEM-resident across all grid steps.
        return pl.BlockSpec(arr.shape, lambda i: (0, 0))

    ordered_params = (w1b, b1, g1, be1, w2b, b2, g2, be2, w3b, b3, g3, be3, w4_row, b4)
    in_specs = [pl.BlockSpec((tb, INPUT_DIM), lambda i: (i, 0))]
    in_specs += [resident(p) for p in ordered_params]

    param_bytes = sum(int(p.size) * p.dtype.itemsize for p in ordered_params)
    flops = 2 * b_pad * (32 * 128 + 128 * 64 + 64 * 32 + 32) + 10 * b_pad * (128 + 64 + 32)
    cost = pl.CostEstimate(
        flops=flops,
        transcendentals=3 * b_pad,                       # one rsqrt per row per LayerNorm
        bytes_accessed=b_pad * INPUT_DIM * 4 + b_pad * 4 + param_bytes,
    )

    out = pl.pallas_call(
        surrogate_kernel,
        out_shape=jax.ShapeDtypeStruct((b_pad, 1), jnp.float32),
        grid=grid,
        in_specs=in_specs,
        out_specs=pl.BlockSpec((tb, 1), lambda i: (i, 0)),
        compiler_params=pltpu.CompilerParams(
            dimension_semantics=("parallel",),           # megacore sharding on v7x
            vmem_limit_bytes=32 * 1024 * 1024,           # safe on v5e/v6e/v7x; ample for TB=2048
        ),
        cost_estimate=cost,
    )(x_in, *ordered_params)

    # .squeeze(-1) from the PyTorch module + drop any alignment-pad rows.
    return out[:batch, 0]


def init_params(key, input_dim, hidden_dims):
    """Deterministic init mimicking PyTorch defaults.

    Linear: W, b ~ U(-1/sqrt(fan_in), 1/sqrt(fan_in));  LayerNorm: gamma=1, beta=0.
    Weights stored as (in_features, out_features); biases / LN params as (1, out).
    """
    params = []
    prev = input_dim
    for h in list(hidden_dims):
        key, kw, kb = jax.random.split(key, 3)
        bound = 1.0 / jnp.sqrt(jnp.float32(prev))
        w = jax.random.uniform(kw, (prev, h), jnp.float32, -bound, bound)
        b = jax.random.uniform(kb, (1, h), jnp.float32, -bound, bound)
        params.extend([w, b, jnp.ones((1, h), jnp.float32), jnp.zeros((1, h), jnp.float32)])
        prev = h
    key, kw, kb = jax.random.split(key, 3)
    bound = 1.0 / jnp.sqrt(jnp.float32(prev))
    w4 = jax.random.uniform(kw, (prev, 1), jnp.float32, -bound, bound)
    b4 = jax.random.uniform(kb, (1, 1), jnp.float32, -bound, bound)
    params.extend([w4, b4])
    return params


def reference_forward(x, params):
    """Pure-JAX f32 reference of the same math (for sanity checking)."""
    (w1, b1, g1, be1, w2, b2, g2, be2, w3, b3, g3, be3, w4, b4) = params
    h = x
    for (w, b, g, be) in ((w1, b1, g1, be1), (w2, b2, g2, be2), (w3, b3, g3, be3)):
        h = h @ w + b
        mean = jnp.mean(h, axis=-1, keepdims=True)
        var = jnp.mean((h - mean) ** 2, axis=-1, keepdims=True)
        h = (h - mean) / jnp.sqrt(var + LN_EPS) * g + be
        h = jnp.maximum(h, 0.0)
    return (h @ w4 + b4)[:, 0]


if __name__ == "__main__":
    key = jax.random.PRNGKey(0)
    key_x, key_p = jax.random.split(key)
    params = tuple(init_params(key_p, INPUT_DIM, HIDDEN_DIMS))

    # Small batch: single grid step, block == array extent.
    x_small = jax.random.normal(key_x, (8, INPUT_DIM), jnp.float32)
    y_small = jax.block_until_ready(surrogate_forward(x_small, params))
    ref_small = reference_forward(x_small, params)
    assert y_small.shape == (8,), y_small.shape
    # bf16 matmul operands -> loosened tolerance vs. the f32 reference.
    assert jnp.allclose(y_small, ref_small, atol=5e-2, rtol=5e-2), (y_small, ref_small)

    # Ragged batch: multi-step grid with a masked partial last block, NO full pad
    # (200 rows, tile clamps to 128 -> grid of 2, last block 72 valid rows).
    x_big = jax.random.normal(jax.random.PRNGKey(1), (200, INPUT_DIM), jnp.float32)
    y_big = jax.block_until_ready(surrogate_forward(x_big, params))
    ref_big = reference_forward(x_big, params)
    assert y_big.shape == (200,), y_big.shape
    assert jnp.allclose(y_big, ref_big, atol=5e-2, rtol=5e-2), (y_big, ref_big)

    # Non-sublane-aligned batch: exercises the tiny (<=7 row) alignment-pad path.
    x_odd = jax.random.normal(jax.random.PRNGKey(2), (13, INPUT_DIM), jnp.float32)
    y_odd = jax.block_until_ready(surrogate_forward(x_odd, params))
    ref_odd = reference_forward(x_odd, params)
    assert y_odd.shape == (13,), y_odd.shape
    assert jnp.allclose(y_odd, ref_odd, atol=5e-2, rtol=5e-2), (y_odd, ref_odd)

    print("KERNEL_OK")
</pallas_src>

<mosaic_0001>
module attributes {stable_mosaic.version = 11 : i64} {
  func.func @surrogate_kernel(%arg0: i32, %arg1: memref<8x32xf32, #tpu.memory_space<vmem>>, %arg2: memref<32x128xbf16, #tpu.memory_space<vmem>>, %arg3: memref<1x128xf32, #tpu.memory_space<vmem>>, %arg4: memref<1x128xf32, #tpu.memory_space<vmem>>, %arg5: memref<1x128xf32, #tpu.memory_space<vmem>>, %arg6: memref<128x64xbf16, #tpu.memory_space<vmem>>, %arg7: memref<1x64xf32, #tpu.memory_space<vmem>>, %arg8: memref<1x64xf32, #tpu.memory_space<vmem>>, %arg9: memref<1x64xf32, #tpu.memory_space<vmem>>, %arg10: memref<64x32xbf16, #tpu.memory_space<vmem>>, %arg11: memref<1x32xf32, #tpu.memory_space<vmem>>, %arg12: memref<1x32xf32, #tpu.memory_space<vmem>>, %arg13: memref<1x32xf32, #tpu.memory_space<vmem>>, %arg14: memref<1x32xf32, #tpu.memory_space<vmem>>, %arg15: memref<1x1xf32, #tpu.memory_space<vmem>>, %arg16: memref<8x1xf32, #tpu.memory_space<vmem>>) attributes {dimension_semantics = [#tpu.dimension_semantics<parallel>], iteration_bounds = array<i64: 1>, scalar_prefetch = 0 : i64, scratch_operands = 0 : i64, tpu.core_type = #tpu.core_type<tc>, window_params = [{transform_indices = @transform_0, window_bounds = array<i64: 8, 32>}, {pipeline_mode = #tpu.pipeline_mode<synchronous>, transform_indices = @transform_1, window_bounds = array<i64: 32, 128>}, {pipeline_mode = #tpu.pipeline_mode<synchronous>, transform_indices = @transform_2, window_bounds = array<i64: 1, 128>}, {pipeline_mode = #tpu.pipeline_mode<synchronous>, transform_indices = @transform_3, window_bounds = array<i64: 1, 128>}, {pipeline_mode = #tpu.pipeline_mode<synchronous>, transform_indices = @transform_4, window_bounds = array<i64: 1, 128>}, {pipeline_mode = #tpu.pipeline_mode<synchronous>, transform_indices = @transform_5, window_bounds = array<i64: 128, 64>}, {pipeline_mode = #tpu.pipeline_mode<synchronous>, transform_indices = @transform_6, window_bounds = array<i64: 1, 64>}, {pipeline_mode = #tpu.pipeline_mode<synchronous>, transform_indices = @transform_7, window_bounds = array<i64: 1, 64>}, {pipeline_mode = #tpu.pipeline_mode<synchronous>, transform_indices = @transform_8, window_bounds = array<i64: 1, 64>}, {pipeline_mode = #tpu.pipeline_mode<synchronous>, transform_indices = @transform_9, window_bounds = array<i64: 64, 32>}, {pipeline_mode = #tpu.pipeline_mode<synchronous>, transform_indices = @transform_10, window_bounds = array<i64: 1, 32>}, {pipeline_mode = #tpu.pipeline_mode<synchronous>, transform_indices = @transform_11, window_bounds = array<i64: 1, 32>}, {pipeline_mode = #tpu.pipeline_mode<synchronous>, transform_indices = @transform_12, window_bounds = array<i64: 1, 32>}, {pipeline_mode = #tpu.pipeline_mode<synchronous>, transform_indices = @transform_13, window_bounds = array<i64: 1, 32>}, {pipeline_mode = #tpu.pipeline_mode<synchronous>, transform_indices = @transform_14, window_bounds = array<i64: 1, 1>}, {transform_indices = @transform_15, window_bounds = array<i64: 8, 1>}]} {
    %c0 = arith.constant 0 : index
    %c0_0 = arith.constant 0 : index
    %0 = vector.load %arg1[%c0, %c0_0] : memref<8x32xf32, #tpu.memory_space<vmem>>, vector<8x32xf32>
    %c0_1 = arith.constant 0 : index
    %c0_2 = arith.constant 0 : index
    %1 = vector.load %arg2[%c0_1, %c0_2] : memref<32x128xbf16, #tpu.memory_space<vmem>>, vector<32x128xbf16>
    %c0_3 = arith.constant 0 : index
    %c0_4 = arith.constant 0 : index
    %2 = vector.load %arg3[%c0_3, %c0_4] : memref<1x128xf32, #tpu.memory_space<vmem>>, vector<1x128xf32>
    %c0_5 = arith.constant 0 : index
    %c0_6 = arith.constant 0 : index
    %3 = vector.load %arg4[%c0_5, %c0_6] : memref<1x128xf32, #tpu.memory_space<vmem>>, vector<1x128xf32>
    %c0_7 = arith.constant 0 : index
    %c0_8 = arith.constant 0 : index
    %4 = vector.load %arg5[%c0_7, %c0_8] : memref<1x128xf32, #tpu.memory_space<vmem>>, vector<1x128xf32>
    %5 = arith.truncf %0 : vector<8x32xf32> to vector<8x32xbf16>
    %cst = arith.constant dense<0.000000e+00> : vector<8x128xf32>
    %6 = tpu.matmul %5, %1, %cst {dimension_numbers = #tpu.dot_dimension_numbers<[1], [0], [0], [1], [0, 0, 1, 1], [], []>} : vector<8x32xbf16>, vector<32x128xbf16>, vector<8x128xf32> -> vector<8x128xf32>
    %7 = vector.broadcast %2 : vector<1x128xf32> to vector<8x128xf32>
    %8 = arith.addf %6, %7 : vector<8x128xf32>
    %cst_9 = arith.constant dense<0.000000e+00> : vector<8xf32>
    %9 = vector.multi_reduction <add>, %8, %cst_9 [1] : vector<8x128xf32> to vector<8xf32>
    %10 = vector.shape_cast %9 : vector<8xf32> to vector<8x1xf32>
    %cst_10 = arith.constant 7.812500e-03 : f32
    %11 = vector.broadcast %cst_10 : f32 to vector<8x1xf32>
    %12 = arith.mulf %10, %11 : vector<8x1xf32>
    %13 = vector.broadcast %12 : vector<8x1xf32> to vector<8x128xf32>
    %14 = arith.subf %8, %13 : vector<8x128xf32>
    %15 = arith.mulf %14, %14 : vector<8x128xf32>
    %cst_11 = arith.constant dense<0.000000e+00> : vector<8xf32>
    %16 = vector.multi_reduction <add>, %15, %cst_11 [1] : vector<8x128xf32> to vector<8xf32>
    %17 = vector.shape_cast %16 : vector<8xf32> to vector<8x1xf32>
    %cst_12 = arith.constant 7.812500e-03 : f32
    %18 = vector.broadcast %cst_12 : f32 to vector<8x1xf32>
    %19 = arith.mulf %17, %18 : vector<8x1xf32>
    %cst_13 = arith.constant 9.99999974E-6 : f32
    %20 = vector.broadcast %cst_13 : f32 to vector<8x1xf32>
    %21 = arith.addf %19, %20 : vector<8x1xf32>
    %22 = math.rsqrt %21 : vector<8x1xf32>
    %23 = vector.broadcast %22 : vector<8x1xf32> to vector<8x128xf32>
    %24 = arith.mulf %14, %23 : vector<8x128xf32>
    %25 = vector.broadcast %3 : vector<1x128xf32> to vector<8x128xf32>
    %26 = arith.mulf %24, %25 : vector<8x128xf32>
    %27 = vector.broadcast %4 : vector<1x128xf32> to vector<8x128xf32>
    %28 = arith.addf %26, %27 : vector<8x128xf32>
    %cst_14 = arith.constant 0.000000e+00 : f32
    %29 = vector.broadcast %cst_14 : f32 to vector<8x128xf32>
    %30 = arith.maximumf %28, %29 : vector<8x128xf32>
    %c0_15 = arith.constant 0 : index
    %c0_16 = arith.constant 0 : index
    %31 = vector.load %arg6[%c0_15, %c0_16] : memref<128x64xbf16, #tpu.memory_space<vmem>>, vector<128x64xbf16>
    %c0_17 = arith.constant 0 : index
    %c0_18 = arith.constant 0 : index
    %32 = vector.load %arg7[%c0_17, %c0_18] : memref<1x64xf32, #tpu.memory_space<vmem>>, vector<1x64xf32>
    %c0_19 = arith.constant 0 : index
    %c0_20 = arith.constant 0 : index
    %33 = vector.load %arg8[%c0_19, %c0_20] : memref<1x64xf32, #tpu.memory_space<vmem>>, vector<1x64xf32>
    %c0_21 = arith.constant 0 : index
    %c0_22 = arith.constant 0 : index
    %34 = vector.load %arg9[%c0_21, %c0_22] : memref<1x64xf32, #tpu.memory_space<vmem>>, vector<1x64xf32>
    %35 = arith.truncf %30 : vector<8x128xf32> to vector<8x128xbf16>
    %cst_23 = arith.constant dense<0.000000e+00> : vector<8x64xf32>
    %36 = tpu.matmul %35, %31, %cst_23 {dimension_numbers = #tpu.dot_dimension_numbers<[1], [0], [0], [1], [0, 0, 1, 1], [], []>} : vector<8x128xbf16>, vector<128x64xbf16>, vector<8x64xf32> -> vector<8x64xf32>
    %37 = vector.broadcast %32 : vector<1x64xf32> to vector<8x64xf32>
    %38 = arith.addf %36, %37 : vector<8x64xf32>
    %cst_24 = arith.constant dense<0.000000e+00> : vector<8xf32>
    %39 = vector.multi_reduction <add>, %38, %cst_24 [1] : vector<8x64xf32> to vector<8xf32>
    %40 = vector.shape_cast %39 : vector<8xf32> to vector<8x1xf32>
    %cst_25 = arith.constant 1.562500e-02 : f32
    %41 = vector.broadcast %cst_25 : f32 to vector<8x1xf32>
    %42 = arith.mulf %40, %41 : vector<8x1xf32>
    %43 = vector.broadcast %42 : vector<8x1xf32> to vector<8x64xf32>
    %44 = arith.subf %38, %43 : vector<8x64xf32>
    %45 = arith.mulf %44, %44 : vector<8x64xf32>
    %cst_26 = arith.constant dense<0.000000e+00> : vector<8xf32>
    %46 = vector.multi_reduction <add>, %45, %cst_26 [1] : vector<8x64xf32> to vector<8xf32>
    %47 = vector.shape_cast %46 : vector<8xf32> to vector<8x1xf32>
    %cst_27 = arith.constant 1.562500e-02 : f32
    %48 = vector.broadcast %cst_27 : f32 to vector<8x1xf32>
    %49 = arith.mulf %47, %48 : vector<8x1xf32>
    %cst_28 = arith.constant 9.99999974E-6 : f32
    %50 = vector.broadcast %cst_28 : f32 to vector<8x1xf32>
    %51 = arith.addf %49, %50 : vector<8x1xf32>
    %52 = math.rsqrt %51 : vector<8x1xf32>
    %53 = vector.broadcast %52 : vector<8x1xf32> to vector<8x64xf32>
    %54 = arith.mulf %44, %53 : vector<8x64xf32>
    %55 = vector.broadcast %33 : vector<1x64xf32> to vector<8x64xf32>
    %56 = arith.mulf %54, %55 : vector<8x64xf32>
    %57 = vector.broadcast %34 : vector<1x64xf32> to vector<8x64xf32>
    %58 = arith.addf %56, %57 : vector<8x64xf32>
    %cst_29 = arith.constant 0.000000e+00 : f32
    %59 = vector.broadcast %cst_29 : f32 to vector<8x64xf32>
    %60 = arith.maximumf %58, %59 : vector<8x64xf32>
    %c0_30 = arith.constant 0 : index
    %c0_31 = arith.constant 0 : index
    %61 = vector.load %arg10[%c0_30, %c0_31] : memref<64x32xbf16, #tpu.memory_space<vmem>>, vector<64x32xbf16>
    %c0_32 = arith.constant 0 : index
    %c0_33 = arith.constant 0 : index
    %62 = vector.load %arg11[%c0_32, %c0_33] : memref<1x32xf32, #tpu.memory_space<vmem>>, vector<1x32xf32>
    %c0_34 = arith.constant 0 : index
    %c0_35 = arith.constant 0 : index
    %63 = vector.load %arg12[%c0_34, %c0_35] : memref<1x32xf32, #tpu.memory_space<vmem>>, vector<1x32xf32>
    %c0_36 = arith.constant 0 : index
    %c0_37 = arith.constant 0 : index
    %64 = vector.load %arg13[%c0_36, %c0_37] : memref<1x32xf32, #tpu.memory_space<vmem>>, vector<1x32xf32>
    %65 = arith.truncf %60 : vector<8x64xf32> to vector<8x64xbf16>
    %cst_38 = arith.constant dense<0.000000e+00> : vector<8x32xf32>
    %66 = tpu.matmul %65, %61, %cst_38 {dimension_numbers = #tpu.dot_dimension_numbers<[1], [0], [0], [1], [0, 0, 1, 1], [], []>} : vector<8x64xbf16>, vector<64x32xbf16>, vector<8x32xf32> -> vector<8x32xf32>
    %67 = vector.broadcast %62 : vector<1x32xf32> to vector<8x32xf32>
    %68 = arith.addf %66, %67 : vector<8x32xf32>
    %cst_39 = arith.constant dense<0.000000e+00> : vector<8xf32>
    %69 = vector.multi_reduction <add>, %68, %cst_39 [1] : vector<8x32xf32> to vector<8xf32>
    %70 = vector.shape_cast %69 : vector<8xf32> to vector<8x1xf32>
    %cst_40 = arith.constant 3.125000e-02 : f32
    %71 = vector.broadcast %cst_40 : f32 to vector<8x1xf32>
    %72 = arith.mulf %70, %71 : vector<8x1xf32>
    %73 = vector.broadcast %72 : vector<8x1xf32> to vector<8x32xf32>
    %74 = arith.subf %68, %73 : vector<8x32xf32>
    %75 = arith.mulf %74, %74 : vector<8x32xf32>
    %cst_41 = arith.constant dense<0.000000e+00> : vector<8xf32>
    %76 = vector.multi_reduction <add>, %75, %cst_41 [1] : vector<8x32xf32> to vector<8xf32>
    %77 = vector.shape_cast %76 : vector<8xf32> to vector<8x1xf32>
    %cst_42 = arith.constant 3.125000e-02 : f32
    %78 = vector.broadcast %cst_42 : f32 to vector<8x1xf32>
    %79 = arith.mulf %77, %78 : vector<8x1xf32>
    %cst_43 = arith.constant 9.99999974E-6 : f32
    %80 = vector.broadcast %cst_43 : f32 to vector<8x1xf32>
    %81 = arith.addf %79, %80 : vector<8x1xf32>
    %82 = math.rsqrt %81 : vector<8x1xf32>
    %83 = vector.broadcast %82 : vector<8x1xf32> to vector<8x32xf32>
    %84 = arith.mulf %74, %83 : vector<8x32xf32>
    %85 = vector.broadcast %63 : vector<1x32xf32> to vector<8x32xf32>
    %86 = arith.mulf %84, %85 : vector<8x32xf32>
    %87 = vector.broadcast %64 : vector<1x32xf32> to vector<8x32xf32>
    %88 = arith.addf %86, %87 : vector<8x32xf32>
    %cst_44 = arith.constant 0.000000e+00 : f32
    %89 = vector.broadcast %cst_44 : f32 to vector<8x32xf32>
    %90 = arith.maximumf %88, %89 : vector<8x32xf32>
    %c0_45 = arith.constant 0 : index
    %c0_46 = arith.constant 0 : index
    %91 = vector.load %arg14[%c0_45, %c0_46] : memref<1x32xf32, #tpu.memory_space<vmem>>, vector<1x32xf32>
    %92 = vector.broadcast %91 : vector<1x32xf32> to vector<8x32xf32>
    %93 = arith.mulf %90, %92 : vector<8x32xf32>
    %cst_47 = arith.constant dense<0.000000e+00> : vector<8xf32>
    %94 = vector.multi_reduction <add>, %93, %cst_47 [1] : vector<8x32xf32> to vector<8xf32>
    %95 = vector.shape_cast %94 : vector<8xf32> to vector<8x1xf32>
    %c0_48 = arith.constant 0 : index
    %c0_49 = arith.constant 0 : index
    %96 = vector.load %arg15[%c0_48, %c0_49] : memref<1x1xf32, #tpu.memory_space<vmem>>, vector<1x1xf32>
    %97 = vector.broadcast %96 : vector<1x1xf32> to vector<8x1xf32>
    %98 = arith.addf %95, %97 : vector<8x1xf32>
    %c0_50 = arith.constant 0 : index
    %c0_51 = arith.constant 0 : index
    %99 = vector.load %arg16[%c0_50, %c0_51] : memref<8x1xf32, #tpu.memory_space<vmem>>, vector<8x1xf32>
    tpu.vector_store %arg16[%c0_50, %c0_51], %98 {strides = array<i32>} : memref<8x1xf32, #tpu.memory_space<vmem>>, vector<8x1xf32>,
    return
  }
  func.func @transform_0(%arg0: i32) -> (i32, i32) {
    %c0_i32 = arith.constant 0 : i32
    %c0_i32_0 = arith.constant 0 : i32
    return %arg0, %c0_i32 : i32, i32
  }
  func.func @transform_1(%arg0: i32) -> (i32, i32) {
    %c0_i32 = arith.constant 0 : i32
    %c0_i32_0 = arith.constant 0 : i32
    %c0_i32_1 = arith.constant 0 : i32
    return %c0_i32, %c0_i32_0 : i32, i32
  }
  func.func @transform_2(%arg0: i32) -> (i32, i32) {
    %c0_i32 = arith.constant 0 : i32
    %c0_i32_0 = arith.constant 0 : i32
    %c0_i32_1 = arith.constant 0 : i32
    return %c0_i32, %c0_i32_0 : i32, i32
  }
  func.func @transform_3(%arg0: i32) -> (i32, i32) {
    %c0_i32 = arith.constant 0 : i32
    %c0_i32_0 = arith.constant 0 : i32
    %c0_i32_1 = arith.constant 0 : i32
    return %c0_i32, %c0_i32_0 : i32, i32
  }
  func.func @transform_4(%arg0: i32) -> (i32, i32) {
    %c0_i32 = arith.constant 0 : i32
    %c0_i32_0 = arith.constant 0 : i32
    %c0_i32_1 = arith.constant 0 : i32
    return %c0_i32, %c0_i32_0 : i32, i32
  }
  func.func @transform_5(%arg0: i32) -> (i32, i32) {
    %c0_i32 = arith.constant 0 : i32
    %c0_i32_0 = arith.constant 0 : i32
    %c0_i32_1 = arith.constant 0 : i32
    return %c0_i32, %c0_i32_0 : i32, i32
  }
  func.func @transform_6(%arg0: i32) -> (i32, i32) {
    %c0_i32 = arith.constant 0 : i32
    %c0_i32_0 = arith.constant 0 : i32
    %c0_i32_1 = arith.constant 0 : i32
    return %c0_i32, %c0_i32_0 : i32, i32
  }
  func.func @transform_7(%arg0: i32) -> (i32, i32) {
    %c0_i32 = arith.constant 0 : i32
    %c0_i32_0 = arith.constant 0 : i32
    %c0_i32_1 = arith.constant 0 : i32
    return %c0_i32, %c0_i32_0 : i32, i32
  }
  func.func @transform_8(%arg0: i32) -> (i32, i32) {
    %c0_i32 = arith.constant 0 : i32
    %c0_i32_0 = arith.constant 0 : i32
    %c0_i32_1 = arith.constant 0 : i32
    return %c0_i32, %c0_i32_0 : i32, i32
  }
  func.func @transform_9(%arg0: i32) -> (i32, i32) {
    %c0_i32 = arith.constant 0 : i32
    %c0_i32_0 = arith.constant 0 : i32
    %c0_i32_1 = arith.constant 0 : i32
    return %c0_i32, %c0_i32_0 : i32, i32
  }
  func.func @transform_10(%arg0: i32) -> (i32, i32) {
    %c0_i32 = arith.constant 0 : i32
    %c0_i32_0 = arith.constant 0 : i32
    %c0_i32_1 = arith.constant 0 : i32
    return %c0_i32, %c0_i32_0 : i32, i32
  }
  func.func @transform_11(%arg0: i32) -> (i32, i32) {
    %c0_i32 = arith.constant 0 : i32
    %c0_i32_0 = arith.constant 0 : i32
    %c0_i32_1 = arith.constant 0 : i32
    return %c0_i32, %c0_i32_0 : i32, i32
  }
  func.func @transform_12(%arg0: i32) -> (i32, i32) {
    %c0_i32 = arith.constant 0 : i32
    %c0_i32_0 = arith.constant 0 : i32
    %c0_i32_1 = arith.constant 0 : i32
    return %c0_i32, %c0_i32_0 : i32, i32
  }
  func.func @transform_13(%arg0: i32) -> (i32, i32) {
    %c0_i32 = arith.constant 0 : i32
    %c0_i32_0 = arith.constant 0 : i32
    %c0_i32_1 = arith.constant 0 : i32
    return %c0_i32, %c0_i32_0 : i32, i32
  }
  func.func @transform_14(%arg0: i32) -> (i32, i32) {
    %c0_i32 = arith.constant 0 : i32
    %c0_i32_0 = arith.constant 0 : i32
    %c0_i32_1 = arith.constant 0 : i32
    return %c0_i32, %c0_i32_0 : i32, i32
  }
  func.func @transform_15(%arg0: i32) -> (i32, i32) {
    %c0_i32 = arith.constant 0 : i32
    %c0_i32_0 = arith.constant 0 : i32
    return %arg0, %c0_i32 : i32, i32
  }
}

</mosaic_0001>

<llo_original>
// kernel: surrogate_forward.1
$region0: #{surrogate_forward.1}
  #allocation0 [shape = 'u32[]', space=smem, size = 0x4, offset = 0x4, fixed_abs, tag = 'smem constant byte address 0x4 - core index']
  #allocation1 [shape = 'u32[72,128]{1,0:T(1,128)}', space=vmem, size = 0x9000, scoped, tag = 'internal scratch']
  #allocation2 [shape = 'f32[1,1]{1,0:T(1,128)S(1)}', space=vmem, size = 0x200, scoped, tag = 'scoped memory for surrogate_forward.1']
  %s0 = inlined_call_operand.vmem [shape: f32[8,32], index: 0, kind: input, shape index: {}]
  %s1 = inlined_call_operand.vmem [shape: bf16[32,128], index: 1, kind: input, shape index: {}]
  %s2 = inlined_call_operand.vmem [shape: f32[1,128], index: 2, kind: input, shape index: {}]
  %s3 = inlined_call_operand.vmem [shape: f32[1,128], index: 3, kind: input, shape index: {}]
  %s4 = inlined_call_operand.vmem [shape: f32[1,128], index: 4, kind: input, shape index: {}]
  %s5 = inlined_call_operand.vmem [shape: bf16[128,64], index: 5, kind: input, shape index: {}]
  %s6 = inlined_call_operand.vmem [shape: f32[1,64], index: 6, kind: input, shape index: {}]
  %s7 = inlined_call_operand.vmem [shape: f32[1,64], index: 7, kind: input, shape index: {}]
  %s8 = inlined_call_operand.vmem [shape: f32[1,64], index: 8, kind: input, shape index: {}]
  %s9 = inlined_call_operand.vmem [shape: bf16[64,32], index: 9, kind: input, shape index: {}]
  %s10 = inlined_call_operand.vmem [shape: f32[1,32], index: 10, kind: input, shape index: {}]
  %s11 = inlined_call_operand.vmem [shape: f32[1,32], index: 11, kind: input, shape index: {}]
  %s12 = inlined_call_operand.vmem [shape: f32[1,32], index: 12, kind: input, shape index: {}]
  %s13 = inlined_call_operand.vmem [shape: f32[1,32], index: 13, kind: input, shape index: {}]
  %s14 = inlined_call_operand.<no memory space> [shape: f32[1,1], index: 14, kind: input, shape index: {}]
  %s15 = inlined_call_operand.vmem [shape: f32[8,1], index: 15, kind: output, shape index: {}]
  %s16 = sld [smem:[#allocation0]]
  $region70: #{surrogate_forward.1} parent=0
    _
  %s18 = ssub.s32 1, %s16
  %s19 = scalar_select 0, %s18, %s16
  %v20 = vstv %s14
  %21 = vst [vmem:[#allocation2] sm:$0x1] %v20
  // Predicated region
  $region2: #{surrogate_forward.1} parent=0 // pred_check
    _
  $region3: #{surrogate_forward.1} parent=0 // pred_check_branch
    %23 = sbr.rel (0) target = $region5
  $region4: #{surrogate_forward.1} parent=0 // pred_region
    _
  $region5: #{surrogate_forward.1} parent=0 // pred_fallthru
    _
  // Predicated region
  $region6: #{surrogate_forward.1} parent=0 // pred_check
    _
  $region7: #{surrogate_forward.1} parent=0 // pred_check_branch
    %25 = sbr.rel (0) target = $region9
  $region8: #{surrogate_forward.1} parent=0 // pred_region
    _
  $region9: #{surrogate_forward.1} parent=0 // pred_fallthru
    _
  // Predicated region
  $region10: #{surrogate_forward.1} parent=0 // pred_check
    _
  $region11: #{surrogate_forward.1} parent=0 // pred_check_branch
    %27 = sbr.rel (0) target = $region13
  $region12: #{surrogate_forward.1} parent=0 // pred_region
    _
  $region13: #{surrogate_forward.1} parent=0 // pred_fallthru
    _
  // Predicated region
  $region14: #{surrogate_forward.1} parent=0 // pred_check
    _
  $region15: #{surrogate_forward.1} parent=0 // pred_check_branch
    %29 = sbr.rel (0) target = $region17
  $region16: #{surrogate_forward.1} parent=0 // pred_region
    _
  $region17: #{surrogate_forward.1} parent=0 // pred_fallthru
    _
  // Predicated region
  $region18: #{surrogate_forward.1} parent=0 // pred_check
    _
  $region19: #{surrogate_forward.1} parent=0 // pred_check_branch
    %31 = sbr.rel (0) target = $region21
  $region20: #{surrogate_forward.1} parent=0 // pred_region
    _
  $region21: #{surrogate_forward.1} parent=0 // pred_fallthru
    _
  // Predicated region
  $region22: #{surrogate_forward.1} parent=0 // pred_check
    _
  $region23: #{surrogate_forward.1} parent=0 // pred_check_branch
    %33 = sbr.rel (0) target = $region25
  $region24: #{surrogate_forward.1} parent=0 // pred_region
    _
  $region25: #{surrogate_forward.1} parent=0 // pred_fallthru
    _
  // Predicated region
  $region26: #{surrogate_forward.1} parent=0 // pred_check
    _
  $region27: #{surrogate_forward.1} parent=0 // pred_check_branch
    %35 = sbr.rel (0) target = $region29
  $region28: #{surrogate_forward.1} parent=0 // pred_region
    _
  $region29: #{surrogate_forward.1} parent=0 // pred_fallthru
    _
  // Predicated region
  $region30: #{surrogate_forward.1} parent=0 // pred_check
    _
  $region31: #{surrogate_forward.1} parent=0 // pred_check_branch
    %37 = sbr.rel (0) target = $region33
  $region32: #{surrogate_forward.1} parent=0 // pred_region
    _
  $region33: #{surrogate_forward.1} parent=0 // pred_fallthru
    _
  // Predicated region
  $region34: #{surrogate_forward.1} parent=0 // pred_check
    _
  $region35: #{surrogate_forward.1} parent=0 // pred_check_branch
    %39 = sbr.rel (0) target = $region37
  $region36: #{surrogate_forward.1} parent=0 // pred_region
    _
  $region37: #{surrogate_forward.1} parent=0 // pred_fallthru
    _
  // Predicated region
  $region38: #{surrogate_forward.1} parent=0 // pred_check
    _
  $region39: #{surrogate_forward.1} parent=0 // pred_check_branch
    %41 = sbr.rel (0) target = $region41
  $region40: #{surrogate_forward.1} parent=0 // pred_region
    _
  $region41: #{surrogate_forward.1} parent=0 // pred_fallthru
    _
  // Predicated region
  $region42: #{surrogate_forward.1} parent=0 // pred_check
    _
  $region43: #{surrogate_forward.1} parent=0 // pred_check_branch
    %43 = sbr.rel (0) target = $region45
  $region44: #{surrogate_forward.1} parent=0 // pred_region
    _
  $region45: #{surrogate_forward.1} parent=0 // pred_fallthru
    _
  // Predicated region
  $region46: #{surrogate_forward.1} parent=0 // pred_check
    _
  $region47: #{surrogate_forward.1} parent=0 // pred_check_branch
    %45 = sbr.rel (0) target = $region49
  $region48: #{surrogate_forward.1} parent=0 // pred_region
    _
  $region49: #{surrogate_forward.1} parent=0 // pred_fallthru
    _
  // Predicated region
  $region50: #{surrogate_forward.1} parent=0 // pred_check
    _
  $region51: #{surrogate_forward.1} parent=0 // pred_check_branch
    %47 = sbr.rel (0) target = $region53
  $region52: #{surrogate_forward.1} parent=0 // pred_region
    _
  $region53: #{surrogate_forward.1} parent=0 // pred_fallthru
    _
  // Predicated region
  $region54: #{surrogate_forward.1} parent=0 // pred_check
    _
  $region55: #{surrogate_forward.1} parent=0 // pred_check_branch
    %49 = sbr.rel (0) target = $region57
  $region56: #{surrogate_forward.1} parent=0 // pred_region
    _
  $region57: #{surrogate_forward.1} parent=0 // pred_fallthru
    _
  // Predicated region
  $region58: #{surrogate_forward.1} parent=0 // pred_check
    _
  $region59: #{surrogate_forward.1} parent=0 // pred_check_branch
    %51 = sbr.rel (0) target = $region61
  $region60: #{surrogate_forward.1} parent=0 // pred_region
    _
  $region61: #{surrogate_forward.1} parent=0 // pred_fallthru
    _
  %v53 = vld [vmem:[%s0] sm:$0xff]
  %v54 = vld [vmem:[%s1] sm:$0xf]
  %v55 = vld [vmem:[%s1 + $0x4] sm:$0xf]
  %v56 = vld [vmem:[%s1 + $0x8] sm:$0xf]
  %v57 = vld [vmem:[%s1 + $0xc] sm:$0xf]
  %v58 = vld [vmem:[%s2] sm:$0x1]
  %v59 = vld [vmem:[%s3] sm:$0x1]
  %v60 = vld [vmem:[%s4] sm:$0x1]
  %v61 = vpack.c.bf16 %v53, %v53
  %v63 = vperm.slane %v58, 0
  %v69 = vunpack.c.l.b16 %v54
  %v70 = vunpack.c.l.b16 %v55
  %v71 = vunpack.c.l.b16 %v56
  %v72 = vunpack.c.l.b16 %v57
  %v73 = vpack.c.b16 %v70, %v69
  %v74 = vpack.c.b16 %v72, %v71
  %vm77 = vcmask 261120
  %v79 = vsel %vm77, %v61, 0
  %81 = vmatpush.bf16.msra.mxu0 0
  %82 = vmatpush.bf16.msra.mxu0 0
  %83 = vmatpush.bf16.msra.mxu0 0
  %84 = vmatpush.bf16.msra.mxu0 0
  %85 = vmatpush.bf16.msra.mxu0 0
  %86 = vmatpush.bf16.msra.mxu0 0
  %87 = vmatpush.bf16.msra.mxu0 %v74
  %88 = vmatpush.bf16.msra.mxu0 %v73
  %89 = vmatmul.bf16.gmra.mxu0 %v79
  %v90 = vpop.f32.mrf.mxu0
  %v91 = vadd.f32 %v63, %v90
  %v92 = vpop.f32.mrf.mxu0
  %93 = vdwg.mxu0
  %94 = vadd.xlane.f32.xlu0 %v91
  %v95 = vpop.xlane.xlu0 %94
  %v96 = vmul.f32 %v95, 0.0078125
  %v97 = vsub.f32 %v91, %v96
  %v98 = vmul.f32 %v97, %v97
  %99 = vadd.xlane.f32.xlu0 %v98
  %v100 = vpop.xlane.xlu0 %99
  %v101 = vmul.f32 %v100, 0.0078125
  %v102 = vadd.f32 %v101, 1e-05
  %v103 = vrsqrt.pop %v102
  %v104 = vmul.f32 %v103, %v102
  %v105 = vmul.f32 %v104, %v103
  %v106 = vmul.f32 0.5, %v105
  %v107 = vsub.f32 1.5, %v106
  %v108 = vmul.f32 %v103, %v107
  %vm109 = vweird.f32 %v102
  %vm110 = vweird.f32 %v103
  %vm111 = vmor %vm109, %vm110
  %v112 = vsel %vm111, %v103, %v108
  %v113 = vmul.f32 %v97, %v112
  %v115 = vperm.slane %v59, 0
  %v117 = vmul.f32 %v113, %v115
  %v119 = vperm.slane %v60, 0
  %v121 = vadd.f32 %v117, %v119
  %v122 = vmax.f32 %v121, 0.0
  %v123 = vld [vmem:[%s5] sm:$0xf]
  %v124 = vld [vmem:[%s5 + $0x4] sm:$0xf]
  %v125 = vld [vmem:[%s5 + $0x8] sm:$0xf]
  %v126 = vld [vmem:[%s5 + $0xc] sm:$0xf]
  %v127 = vld [vmem:[%s5 + $0x10] sm:$0xf]
  %v128 = vld [vmem:[%s5 + $0x14] sm:$0xf]
  %v129 = vld [vmem:[%s5 + $0x18] sm:$0xf]
  %v130 = vld [vmem:[%s5 + $0x1c] sm:$0xf]
  %v131 = vld [vmem:[%s5 + $0x20] sm:$0xf]
  %v132 = vld [vmem:[%s5 + $0x24] sm:$0xf]
  %v133 = vld [vmem:[%s5 + $0x28] sm:$0xf]
  %v134 = vld [vmem:[%s5 + $0x2c] sm:$0xf]
  %v135 = vld [vmem:[%s5 + $0x30] sm:$0xf]
  %v136 = vld [vmem:[%s5 + $0x34] sm:$0xf]
  %v137 = vld [vmem:[%s5 + $0x38] sm:$0xf]
  %v138 = vld [vmem:[%s5 + $0x3c] sm:$0xf]
  %v139 = vld [vmem:[%s6] sm:$0x1]
  %v140 = vld [vmem:[%s7] sm:$0x1]
  %v141 = vld [vmem:[%s8] sm:$0x1]
  %v142 = vpack.c.bf16 %v122, %v122
  %v144 = vperm.slane %v139, 0
  %v162 = vunpack.c.l.b16 %v123
  %v163 = vunpack.c.l.b16 %v124
  %v164 = vunpack.c.l.b16 %v125
  %v165 = vunpack.c.l.b16 %v126
  %v166 = vunpack.c.l.b16 %v127
  %v167 = vunpack.c.l.b16 %v128
  %v168 = vunpack.c.l.b16 %v129
  %v169 = vunpack.c.l.b16 %v130
  %v170 = vunpack.c.l.b16 %v131
  %v171 = vunpack.c.l.b16 %v132
  %v172 = vunpack.c.l.b16 %v133
  %v173 = vunpack.c.l.b16 %v134
  %v174 = vunpack.c.l.b16 %v135
  %v175 = vunpack.c.l.b16 %v136
  %v176 = vunpack.c.l.b16 %v137
  %v177 = vunpack.c.l.b16 %v138
  %v178 = vpack.c.b16 %v163, %v162
  %v179 = vpack.c.b16 %v165, %v164
  %v180 = vpack.c.b16 %v167, %v166
  %v181 = vpack.c.b16 %v169, %v168
  %v182 = vpack.c.b16 %v171, %v170
  %v183 = vpack.c.b16 %v173, %v172
  %v184 = vpack.c.b16 %v175, %v174
  %v185 = vpack.c.b16 %v177, %v176
  %194 = vmatpush.bf16.msra.mxu0 %v185
  %195 = vmatpush.bf16.msra.mxu0 %v184
  %196 = vmatpush.bf16.msra.mxu0 %v183
  %197 = vmatpush.bf16.msra.mxu0 %v182
  %198 = vmatpush.bf16.msra.mxu0 %v181
  %199 = vmatpush.bf16.msra.mxu0 %v180
  %200 = vmatpush.bf16.msra.mxu0 %v179
  %201 = vmatpush.bf16.msra.mxu0 %v178
  %202 = vmatmul.bf16.gmra.mxu0 %v142
  %v203 = vpop.f32.mrf.mxu0
  %v204 = vadd.f32 %v144, %v203
  %v205 = vpop.f32.mrf.mxu0
  %206 = vdwg.mxu0
  %vm207 = vcmask 523264
  %v208 = vsel %vm207, %v204, 0.0
  %209 = vadd.xlane.f32.xlu0 %v208
  %v210 = vpop.xlane.xlu0 %209
  %v211 = vmul.f32 %v210, 0.015625
  %v212 = vsub.f32 %v204, %v211
  %v213 = vmul.f32 %v212, %v212
  %v214 = vsel %vm207, %v213, 0.0
  %215 = vadd.xlane.f32.xlu0 %v214
  %v216 = vpop.xlane.xlu0 %215
  %v217 = vmul.f32 %v216, 0.015625
  %v218 = vadd.f32 %v217, 1e-05
  %v219 = vrsqrt.pop %v218
  %v220 = vmul.f32 %v219, %v218
  %v221 = vmul.f32 %v220, %v219
  %v222 = vmul.f32 0.5, %v221
  %v223 = vsub.f32 1.5, %v222
  %v224 = vmul.f32 %v219, %v223
  %vm225 = vweird.f32 %v218
  %vm226 = vweird.f32 %v219
  %vm227 = vmor %vm225, %vm226
  %v228 = vsel %vm227, %v219, %v224
  %v229 = vmul.f32 %v212, %v228
  %v231 = vperm.slane %v140, 0
  %v233 = vmul.f32 %v229, %v231
  %v235 = vperm.slane %v141, 0
  %v237 = vadd.f32 %v233, %v235
  %v238 = vmax.f32 %v237, 0.0
  %v239 = vld [vmem:[%s9] sm:$0xf]
  %v240 = vld [vmem:[%s9 + $0x4] sm:$0xf]
  %v241 = vld [vmem:[%s9 + $0x8] sm:$0xf]
  %v242 = vld [vmem:[%s9 + $0xc] sm:$0xf]
  %v243 = vld [vmem:[%s9 + $0x10] sm:$0xf]
  %v244 = vld [vmem:[%s9 + $0x14] sm:$0xf]
  %v245 = vld [vmem:[%s9 + $0x18] sm:$0xf]
  %v246 = vld [vmem:[%s9 + $0x1c] sm:$0xf]
  %v247 = vld [vmem:[%s10] sm:$0x1]
  %v248 = vld [vmem:[%s11] sm:$0x1]
  %v249 = vld [vmem:[%s12] sm:$0x1]
  %v250 = vpack.c.bf16 %v238, %v238
  %v252 = vperm.slane %v247, 0
  %v262 = vunpack.c.l.b16 %v239
  %v263 = vunpack.c.l.b16 %v240
  %v264 = vunpack.c.l.b16 %v241
  %v265 = vunpack.c.l.b16 %v242
  %v266 = vunpack.c.l.b16 %v243
  %v267 = vunpack.c.l.b16 %v244
  %v268 = vunpack.c.l.b16 %v245
  %v269 = vunpack.c.l.b16 %v246
  %v270 = vpack.c.b16 %v263, %v262
  %v271 = vpack.c.b16 %v265, %v264
  %v272 = vpack.c.b16 %v267, %v266
  %v273 = vpack.c.b16 %v269, %v268
  %v279 = vsel %vm207, %v250, 0
  %281 = vmatpush.bf16.msra.mxu0 0
  %282 = vmatpush.bf16.msra.mxu0 0
  %283 = vmatpush.bf16.msra.mxu0 0
  %284 = vmatpush.bf16.msra.mxu0 0
  %285 = vmatpush.bf16.msra.mxu0 %v273
  %286 = vmatpush.bf16.msra.mxu0 %v272
  %287 = vmatpush.bf16.msra.mxu0 %v271
  %288 = vmatpush.bf16.msra.mxu0 %v270
  %289 = vmatmul.bf16.gmra.mxu0 %v279
  %v290 = vpop.f32.mrf.mxu0
  %v291 = vadd.f32 %v252, %v290
  %v292 = vpop.f32.mrf.mxu0
  %293 = vdwg.mxu0
  %v294 = vsel %vm77, %v291, 0.0
  %295 = vadd.xlane.f32.xlu0 %v294
  %v296 = vpop.xlane.xlu0 %295
  %v297 = vmul.f32 %v296, 0.03125
  %v298 = vsub.f32 %v291, %v297
  %v299 = vmul.f32 %v298, %v298
  %v300 = vsel %vm77, %v299, 0.0
  %301 = vadd.xlane.f32.xlu0 %v300
  %v302 = vpop.xlane.xlu0 %301
  %v303 = vmul.f32 %v302, 0.03125
  %v304 = vadd.f32 %v303, 1e-05
  %v305 = vrsqrt.pop %v304
  %v306 = vmul.f32 %v305, %v304
  %v307 = vmul.f32 %v306, %v305
  %v308 = vmul.f32 0.5, %v307
  %v309 = vsub.f32 1.5, %v308
  %v310 = vmul.f32 %v305, %v309
  %vm311 = vweird.f32 %v304
  %vm312 = vweird.f32 %v305
  %vm313 = vmor %vm311, %vm312
  %v314 = vsel %vm313, %v305, %v310
  %v315 = vmul.f32 %v298, %v314
  %v317 = vperm.slane %v248, 0
  %v319 = vmul.f32 %v315, %v317
  %v321 = vperm.slane %v249, 0
  %v323 = vadd.f32 %v319, %v321
  %v324 = vmax.f32 %v323, 0.0
  %v325 = vld [vmem:[%s13] sm:$0x1]
  %v327 = vperm.slane %v325, 0
  %v329 = vmul.f32 %v324, %v327
  %v330 = vsel %vm77, %v329, 0.0
  %331 = vadd.xlane.f32.xlu0 %v330
  %v332 = vpop.xlane.xlu0 %331
  %v333 = vld [vmem:[#allocation2] sm:$0x1]
  %v335 = vperm.slane %v333, 0
  %v337 = vadd.f32 %v332, %v335
  %vm338 = vcmask 7168
  %339 = vst.msk [vmem:[%s15] sm:$0xff] %vm338, %v337
  // Predicated region
  $region62: #{surrogate_forward.1} parent=0 // pred_check
    _
  $region63: #{surrogate_forward.1} parent=0 // pred_check_branch
    %341 = sbr.rel (0) target = $region65
  $region64: #{surrogate_forward.1} parent=0 // pred_region
    _
  $region65: #{surrogate_forward.1} parent=0 // pred_fallthru
    _
  // Predicated region
  $region66: #{surrogate_forward.1} parent=0 // pred_check
    _
  $region67: #{surrogate_forward.1} parent=0 // pred_check_branch
    %343 = sbr.rel (0) target = $region69
  $region68: #{surrogate_forward.1} parent=0 // pred_region
    _
  $region69: #{surrogate_forward.1} parent=0 // pred_fallthru
    _

</llo_original>
